<compile_context>
chip_gen: v6e
topology: v6e:2x2x1
jax: 0.10.0
libtpu: 0.0.40
codegen_flags: <defaults>
</compile_context>

<pallas_src>
import jax
import jax.numpy as jnp
from jax.experimental import pallas as pl
from jax.experimental.pallas import tpu as pltpu

_MIB = 1024 * 1024


def _round_up(a, m):
    return -(-a // m) * m


def _sublane_align(dtype):
    """Native sublane packing: 8 rows (f32), 16 (bf16), 32 (int8/fp8)."""
    return max(8, 32 // jnp.dtype(dtype).itemsize)


def _add_pos_batch_kernel(x_ref, pos_ref, o_ref):
    # x_ref / o_ref: (TILE_B, S, D); pos_ref: (S, D) (same block every grid step).
    o_ref[...] = x_ref[...] + pos_ref[...][None, :, :]


def _add_pos_seq_kernel(x_ref, pos_ref, o_ref):
    # x_ref / o_ref: (TILE_S, D) — batch dim squeezed by the BlockSpec.
    # pos_ref:       (TILE_S, D) — stays resident across the inner (batch) axis.
    o_ref[...] = x_ref[...] + pos_ref[...]


def learned_positional_encoding(x, pos_weight, *, target_tile_bytes=6 * _MIB):
    """x: [B, S, D]; pos_weight: [max_len, D]. Returns x + pos_weight[:S] (broadcast over B)."""
    B, S, D = x.shape
    max_len, Dw = pos_weight.shape
    assert Dw == D and S <= max_len
    if pos_weight.dtype != x.dtype:
        pos_weight = pos_weight.astype(x.dtype)

    itemsize = jnp.dtype(x.dtype).itemsize
    row_bytes = D * itemsize
    slab_bytes = S * row_bytes                       # one (S, D) slab
    total_bytes = B * slab_bytes

    # Scheduling hint: one add per element, pure HBM bandwidth.
    cost = pl.CostEstimate(flops=B * S * D, transcendentals=0,
                           bytes_accessed=2 * total_bytes + slab_bytes)

    align = _sublane_align(x.dtype)
    tile_s = max(align, (target_tile_bytes // max(1, row_bytes)) // align * align)

    if slab_bytes <= target_tile_bytes or tile_s >= S:
        # ---- Batch-blocked path (fat DMAs: fold batch into the block) ----
        pos = pos_weight[:S]                         # tiny slice; full-extent block below
        tile_b = max(1, min(B, target_tile_bytes // max(1, slab_bytes)))
        num_b = pl.cdiv(B, tile_b)
        tile_b = pl.cdiv(B, num_b)                   # balance the batch tiles
        num_b = pl.cdiv(B, tile_b)                   # >= 2 whenever total > one tile

        blk_bytes = tile_b * slab_bytes
        footprint = 2 * blk_bytes + 2 * blk_bytes + 2 * slab_bytes
        vmem_limit = int(min(max(footprint + 8 * _MIB, 32 * _MIB), 128 * _MIB))

        return pl.pallas_call(
            _add_pos_batch_kernel,
            out_shape=jax.ShapeDtypeStruct((B, S, D), x.dtype),
            grid=(num_b,),
            in_specs=[
                pl.BlockSpec((tile_b, S, D), lambda b: (b, 0, 0)),
                pl.BlockSpec((S, D), lambda b: (0, 0)),
            ],
            out_specs=pl.BlockSpec((tile_b, S, D), lambda b: (b, 0, 0)),
            compiler_params=pltpu.CompilerParams(
                dimension_semantics=("parallel",),
                vmem_limit_bytes=vmem_limit,
            ),
            cost_estimate=cost,
        )(x, pos)

    # ---- Seq-tiled path (large per-batch slabs) ----
    num_s = pl.cdiv(S, tile_s)                       # >= 2 here since tile_s < S
    tile_s = _round_up(pl.cdiv(S, num_s), align)     # balance tiles, keep sublane alignment
    num_s = pl.cdiv(S, tile_s)

    tile_bytes = tile_s * row_bytes
    footprint = 6 * tile_bytes                       # x, out, pos each double-buffered
    vmem_limit = int(min(max(footprint + 8 * _MIB, 32 * _MIB), 128 * _MIB))

    return pl.pallas_call(
        _add_pos_seq_kernel,
        out_shape=jax.ShapeDtypeStruct((B, S, D), x.dtype),
        grid=(num_s, B),                             # seq OUTER, batch INNER -> pos tile resident
        in_specs=[
            pl.BlockSpec((None, tile_s, D), lambda s, b: (b, s, 0)),
            pl.BlockSpec((tile_s, D), lambda s, b: (s, 0)),
        ],
        out_specs=pl.BlockSpec((None, tile_s, D), lambda s, b: (b, s, 0)),
        compiler_params=pltpu.CompilerParams(
            dimension_semantics=("parallel", "parallel"),
            vmem_limit_bytes=vmem_limit,
        ),
        cost_estimate=cost,
    )(x, pos_weight)


if __name__ == "__main__":
    def ref_fn(x, w):
        s = x.shape[1]
        return x + w[:s][None, :, :]

    key = jax.random.PRNGKey(0)
    k1, k2, k3, k4, k5, k6 = jax.random.split(key, 6)

    # Case 1: small f32 workload (batch-blocked path; demo-scale shapes).
    # nn.init.uniform_ -> U[0, 1) on the embedding table, done deterministically here.
    w1 = jax.random.uniform(k1, (64, 128), dtype=jnp.float32)
    x1 = jax.random.normal(k2, (2, 16, 128), dtype=jnp.float32)
    o1 = jax.block_until_ready(learned_positional_encoding(x1, w1))
    assert o1.shape == x1.shape
    assert jnp.allclose(o1, ref_fn(x1, w1), atol=1e-6), "case 1 mismatch"

    # Case 2: bf16 with seq_len not a multiple of the sublane tile (batch-blocked path).
    w2 = jax.random.uniform(k3, (64, 256), dtype=jnp.bfloat16)
    x2 = jax.random.normal(k4, (3, 20, 256), dtype=jnp.bfloat16)
    o2 = jax.block_until_ready(learned_positional_encoding(x2, w2))
    assert jnp.allclose(o2.astype(jnp.float32),
                        ref_fn(x2, w2).astype(jnp.float32), atol=1e-2), "case 2 mismatch"

    # Case 3: force the seq-tiled path with a tiny tile target (exercises multi-tile
    # grids, partial tail blocks, and pos residency across the inner batch axis).
    w3 = jax.random.uniform(k5, (64, 128), dtype=jnp.float32)
    x3 = jax.random.normal(k6, (2, 44, 128), dtype=jnp.float32)
    o3 = jax.block_until_ready(
        learned_positional_encoding(x3, w3, target_tile_bytes=8 * 1024))
    assert jnp.allclose(o3, ref_fn(x3, w3), atol=1e-6), "case 3 mismatch"

    print("KERNEL_OK")
</pallas_src>

<mosaic_0001>
module attributes {stable_mosaic.version = 11 : i64} {
  func.func @_add_pos_batch_kernel(%arg0: i32, %arg1: memref<2x16x128xf32, #tpu.memory_space<vmem>>, %arg2: memref<16x128xf32, #tpu.memory_space<vmem>>, %arg3: memref<2x16x128xf32, #tpu.memory_space<vmem>>) attributes {dimension_semantics = [#tpu.dimension_semantics<parallel>], iteration_bounds = array<i64: 1>, scalar_prefetch = 0 : i64, scratch_operands = 0 : i64, tpu.core_type = #tpu.core_type<tc>, window_params = [{transform_indices = @transform_0, window_bounds = array<i64: 2, 16, 128>}, {pipeline_mode = #tpu.pipeline_mode<synchronous>, transform_indices = @transform_1, window_bounds = array<i64: 16, 128>}, {transform_indices = @transform_2, window_bounds = array<i64: 2, 16, 128>}]} {
    %c0 = arith.constant 0 : index
    %c0_0 = arith.constant 0 : index
    %c0_1 = arith.constant 0 : index
    %0 = vector.load %arg1[%c0, %c0_0, %c0_1] : memref<2x16x128xf32, #tpu.memory_space<vmem>>, vector<2x16x128xf32>
    %c0_2 = arith.constant 0 : index
    %c0_3 = arith.constant 0 : index
    %1 = vector.load %arg2[%c0_2, %c0_3] : memref<16x128xf32, #tpu.memory_space<vmem>>, vector<16x128xf32>
    %2 = vector.shape_cast %1 : vector<16x128xf32> to vector<1x16x128xf32>
    %3 = vector.broadcast %2 : vector<1x16x128xf32> to vector<2x16x128xf32>
    %4 = arith.addf %0, %3 : vector<2x16x128xf32>
    %c0_4 = arith.constant 0 : index
    %c0_5 = arith.constant 0 : index
    %c0_6 = arith.constant 0 : index
    %5 = vector.load %arg3[%c0_4, %c0_5, %c0_6] : memref<2x16x128xf32, #tpu.memory_space<vmem>>, vector<2x16x128xf32>
    tpu.vector_store %arg3[%c0_4, %c0_5, %c0_6], %4 {strides = array<i32>} : memref<2x16x128xf32, #tpu.memory_space<vmem>>, vector<2x16x128xf32>,
    return
  }
  func.func @transform_0(%arg0: i32) -> (i32, i32, i32) {
    %c0_i32 = arith.constant 0 : i32
    %c0_i32_0 = arith.constant 0 : i32
    %c0_i32_1 = arith.constant 0 : i32
    return %arg0, %c0_i32, %c0_i32_0 : i32, i32, i32
  }
  func.func @transform_1(%arg0: i32) -> (i32, i32) {
    %c0_i32 = arith.constant 0 : i32
    %c0_i32_0 = arith.constant 0 : i32
    %c0_i32_1 = arith.constant 0 : i32
    return %c0_i32, %c0_i32_0 : i32, i32
  }
  func.func @transform_2(%arg0: i32) -> (i32, i32, i32) {
    %c0_i32 = arith.constant 0 : i32
    %c0_i32_0 = arith.constant 0 : i32
    %c0_i32_1 = arith.constant 0 : i32
    return %arg0, %c0_i32, %c0_i32_0 : i32, i32, i32
  }
}

</mosaic_0001>

<llo_original>
// kernel: tpu_custom_call.1
$region0: #{tpu_custom_call.1}
  #allocation0 [shape = 'u32[]', space=smem, size = 0x4, offset = 0x4, fixed_abs, tag = 'smem constant byte address 0x4 - core index']
  #allocation1 [shape = 'u32[144,128]{1,0:T(1,128)}', space=vmem, size = 0x12000, scoped, tag = 'internal scratch']
  %s0 = inlined_call_operand.hbm [shape: f32[2,16,128], index: 0, kind: input, shape index: {}]
  %s1 = inlined_call_operand.hbm [shape: f32[16,128], index: 1, kind: input, shape index: {}]
  %s2 = inlined_call_operand.hbm [shape: f32[2,16,128], index: 2, kind: output, shape index: {}]
  %s3 = sld [smem:[#allocation0]]
  $region26: #{tpu_custom_call.1} parent=0
    _
  %s5 = ssub.s32 1, %s3
  %s6 = scalar_select 0, %s5, %s3
  $region1: #{tpu_custom_call.1} parent=0
    #allocation2 [shape = 'u8[16384]{0}', space=vmem, size = 0x4000, scoped, tag = 'input window, operand 0, single buffered']
    #allocation3 [shape = 's32[1]{0}', space=sflag, size = 0x4, scoped, tag = 'scoped memory for tpu_custom_call.1']
    #allocation4 [shape = 's32[1]{0}', space=sflag, size = 0x4, scoped, tag = 'scoped memory for tpu_custom_call.1']
    #allocation5 [shape = 'u8[8192]{0}', space=vmem, size = 0x2000, scoped, tag = 'input window, operand 1, single buffered']
    #allocation6 [shape = 's32[1]{0}', space=sflag, size = 0x4, scoped, tag = 'scoped memory for tpu_custom_call.1']
    #allocation7 [shape = 'u8[16384]{0}', space=vmem, size = 0x4000, scoped, tag = 'output window, operand 0, single buffered']
    %7 = vsyncpa [#allocation3], 0
    %8 = vsyncpa [#allocation6], 0
    %9 = vsyncpa [#allocation4], 0
    // Predicated region
    $region2: #{tpu_custom_call.1} parent=1 // pred_check
      _
    $region3: #{tpu_custom_call.1} parent=1 // pred_check_branch
      %11 = sbr.rel (0) target = $region5
    $region4: #{tpu_custom_call.1} parent=1 // pred_region
      %s13 = ssub.s32 512, 512
      %14 = vsyncadd [#allocation3], %s13
      %s15 = sshll.u32 [#allocation2], 4
      %s16 = int_to_ptr.vmem [resolvable:$true] %s15
      %21 = dma.hbm_to_vmem [thread:$0]  %s0, 512, %s16, [#allocation3], 128, 128, 8
    $region5: #{tpu_custom_call.1} parent=1 // pred_fallthru
      _
    // Predicated region
    $region6: #{tpu_custom_call.1} parent=1 // pred_check
      _
    $region7: #{tpu_custom_call.1} parent=1 // pred_check_branch
      %23 = sbr.rel (0) target = $region9
    $region8: #{tpu_custom_call.1} parent=1 // pred_region
      %s25 = ssub.s32 256, 256
      %26 = vsyncadd [#allocation6], %s25
      %s27 = sshll.u32 [#allocation5], 4
      %s28 = int_to_ptr.vmem [resolvable:$true] %s27
      %33 = dma.hbm_to_vmem [thread:$0]  %s1, 256, %s28, [#allocation6], 128, 128, 8
    $region9: #{tpu_custom_call.1} parent=1 // pred_fallthru
      _
    // Predicated region
    $region10: #{tpu_custom_call.1} parent=1 // pred_check
      _
    $region11: #{tpu_custom_call.1} parent=1 // pred_check_branch
      %35 = sbr.rel (0) target = $region13
    $region12: #{tpu_custom_call.1} parent=1 // pred_region
      %36 = dma.done [#allocation3], 512
    $region13: #{tpu_custom_call.1} parent=1 // pred_fallthru
      _
    // Predicated region
    $region14: #{tpu_custom_call.1} parent=1 // pred_check
      _
    $region15: #{tpu_custom_call.1} parent=1 // pred_check_branch
      %38 = sbr.rel (0) target = $region17
    $region16: #{tpu_custom_call.1} parent=1 // pred_region
      %39 = dma.done [#allocation6], 256
    $region17: #{tpu_custom_call.1} parent=1 // pred_fallthru
      _
    %v40 = vld [vmem:[#allocation2] sm:$0xff]
    %v41 = vld [vmem:[#allocation2 + $0x8] sm:$0xff]
    %v42 = vld [vmem:[#allocation2 + $0x10] sm:$0xff]
    %v43 = vld [vmem:[#allocation2 + $0x18] sm:$0xff]
    %v44 = vld [vmem:[#allocation5] sm:$0xff]
    %v45 = vld [vmem:[#allocation5 + $0x8] sm:$0xff]
    %v46 = vadd.f32 %v40, %v44
    %v47 = vadd.f32 %v41, %v45
    %v48 = vadd.f32 %v42, %v44
    %v49 = vadd.f32 %v43, %v45
    %50 = vst [vmem:[#allocation7] sm:$0xff] %v46
    %51 = vst [vmem:[#allocation7 + $0x8] sm:$0xff] %v47
    %52 = vst [vmem:[#allocation7 + $0x10] sm:$0xff] %v48
    %53 = vst [vmem:[#allocation7 + $0x18] sm:$0xff] %v49
    // Predicated region
    $region18: #{tpu_custom_call.1} parent=1 // pred_check
      _
    $region19: #{tpu_custom_call.1} parent=1 // pred_check_branch
      %55 = sbr.rel (0) target = $region21
    $region20: #{tpu_custom_call.1} parent=1 // pred_region
      %s57 = ssub.s32 512, 512
      %58 = vsyncadd [#allocation4], %s57
      %s59 = sshll.u32 [#allocation7], 4
      %s60 = int_to_ptr.vmem [resolvable:$true] %s59
      %65 = dma.vmem_to_hbm [thread:$0]  %s60, 512, %s2, [#allocation4], 128, 128, 8
    $region21: #{tpu_custom_call.1} parent=1 // pred_fallthru
      _
    // Predicated region
    $region22: #{tpu_custom_call.1} parent=1 // pred_check
      _
    $region23: #{tpu_custom_call.1} parent=1 // pred_check_branch
      %67 = sbr.rel (0) target = $region25
    $region24: #{tpu_custom_call.1} parent=1 // pred_region
      %68 = dma.done [#allocation4], 512
    $region25: #{tpu_custom_call.1} parent=1 // pred_fallthru
      _
    %69 = vsyncpa [#allocation3], 1
    %70 = vsyncpa [#allocation6], 1
    %71 = vsyncpa [#allocation4], 1

</llo_original>
